<compile_context>
chip_gen: v7x
topology: tpu7x:2x2x1
jax: 0.10.0
libtpu: 0.0.40
codegen_flags: <defaults>
</compile_context>

<pallas_src>
import functools

import jax
import jax.numpy as jnp
import numpy as np
from jax import lax
from jax.experimental import pallas as pl
from jax.experimental.pallas import tpu as pltpu

# Irreps "4x0e + 2x1o + 1x2e"  ->  list of (mul, l, parity)
IRREPS = [(4, 0, 1), (2, 1, -1), (1, 2, 1)]
EPS = 1e-5
_VMEM_LIMIT = 32 * 1024 * 1024


def _round_up(x, m):
    return ((x + m - 1) // m) * m


def _irreps_meta(irreps):
    D = sum(mul * (2 * l + 1) for mul, l, _ in irreps)
    F = sum(mul for mul, _, _ in irreps)
    num_scalar = sum(mul for mul, l, p in irreps if l == 0 and p == 1)
    return D, F, num_scalar


def _build_constants(irreps, normalization="component"):
    """Static matrices encoding the irreps block structure.

    P [D, F]: squared-component -> per-channel norm (mean over d for 'component').
    E [F, D]: per-channel scalar -> broadcast over that channel's d components.
    scalar_cols: flat feature columns belonging to l==0, p==+1 channels.
    """
    D, F, _ = _irreps_meta(irreps)
    P = np.zeros((D, F), np.float32)
    E = np.zeros((F, D), np.float32)
    scalar_cols = []
    col, ch = 0, 0
    for mul, l, p in irreps:
        d = 2 * l + 1
        w = 1.0 if normalization == "norm" else 1.0 / d
        for _ in range(mul):
            P[col:col + d, ch] = w
            E[ch, col:col + d] = 1.0
            if l == 0 and p == 1:
                scalar_cols.append(col)
            col += d
            ch += 1
    return jnp.asarray(P), jnp.asarray(E), np.asarray(scalar_cols, np.int32)


def init_params(irreps):
    """Deterministic params matching the module's __init__ shapes."""
    _, F, num_scalar = _irreps_meta(irreps)
    ms = []
    for mul, l, p in irreps:
        ms.append(np.ones((1, mul, 1), np.float32) if (l == 0 and p == 1)
                  else np.zeros((1, mul, 1), np.float32))
    mean_shift = jnp.asarray(np.concatenate(ms, axis=1))                      # [1, F, 1]
    affine_weight = 1.0 + 0.1 * jnp.arange(F, dtype=jnp.float32)[None, :]     # [1, F]
    affine_bias = 0.05 * jnp.arange(num_scalar, dtype=jnp.float32)[None, :]   # [1, S]
    return dict(mean_shift=mean_shift, affine_weight=affine_weight,
                affine_bias=affine_bias)


# ------------------------------ Pallas kernels ------------------------------ #

def _stats_kernel(batch_row_ref, x_ref, acc_ref, *, num_graphs, num_nodes,
                  node_tile, mask_tail):
    """Accumulate per-graph [sum(x) | sum(x^2)] into one resident [G, 2D] buffer."""
    @pl.when(pl.program_id(0) == 0)
    def _():
        acc_ref[...] = jnp.zeros_like(acc_ref)

    x = x_ref[...].astype(jnp.float32)                     # [TN, D] (in-register upcast)
    tn = x.shape[0]
    if mask_tail:
        # Ragged last block: rows >= N hold undefined VMEM; select them to exactly 0
        # so they cannot poison the sums (0 * NaN would).
        row = (pl.program_id(0) * node_tile
               + lax.broadcasted_iota(jnp.int32, (tn, 1), 0))
        x = jnp.where(row < num_nodes, x, 0.0)
    xcat = jnp.concatenate([x, x * x], axis=-1)            # [TN, 2D]
    b = batch_row_ref[...]                                 # [1, TN] int32 (pad id == G)
    gids = lax.broadcasted_iota(jnp.int32, (num_graphs, tn), 0)
    oht = (gids == b).astype(jnp.float32)                  # [G, TN] built on the fly (VPU)
    acc_ref[...] += jnp.dot(oht, xcat, preferred_element_type=jnp.float32)


def _apply_kernel(batch_col_ref, x_ref, table_ref, o_ref, *, num_graphs, dim):
    """Per-node apply: out = x * scale[batch] + shift[batch] (table = [scale|shift])."""
    x = x_ref[...].astype(jnp.float32)                     # [TN, D]
    b = batch_col_ref[...]                                 # [TN, 1] int32
    tn = x.shape[0]
    if num_graphs <= 8:
        # Small-G: exact VPU select chain (no MXU, no rounding of the table rows).
        t = table_ref[...]                                 # [G, 2D]
        g = jnp.zeros((tn, 2 * dim), jnp.float32)
        for gi in range(num_graphs):
            g = jnp.where(b == gi, t[gi:gi + 1, :], g)     # [TN, 2D]
    else:
        gids = lax.broadcasted_iota(jnp.int32, (tn, num_graphs), 1)
        oh = (gids == b).astype(jnp.float32)               # [TN, G]
        g = jnp.dot(oh, table_ref[...], preferred_element_type=jnp.float32)
    scale = g[:, :dim]
    shift = g[:, dim:]
    o_ref[...] = (x * scale + shift).astype(o_ref.dtype)


# --------------------------------- wrapper ----------------------------------- #

def equivariant_graph_norm_v2(node_input, batch, num_graphs, params,
                              irreps=IRREPS, eps=EPS, normalization="component",
                              node_tile=16384):
    N, D = node_input.shape
    _, F, num_scalar = _irreps_meta(irreps)
    P, E, scalar_cols = _build_constants(irreps, normalization)
    G = int(num_graphs)

    # ---- parameter expansion to the flat feature layout (tiny, one-time) ----
    ms_D = jnp.dot(params["mean_shift"][:, :, 0], E)                 # [1, D]
    w_F = params["affine_weight"]                                    # [1, F]
    bias_D = jnp.zeros((1, D), jnp.float32)
    if num_scalar > 0:
        bias_D = bias_D.at[0, scalar_cols].set(params["affine_bias"][0])

    # ---- tiling: large node tiles; x/out stay at natural (N, D) (ragged edge ok) ----
    if N >= node_tile:
        tn = _round_up(node_tile, 128)       # lane-dense batch row blocks
    else:
        tn = _round_up(N, 8)
    num_tiles = pl.cdiv(N, tn)
    n_pad = num_tiles * tn

    batch_i32 = batch.astype(jnp.int32)
    b_pad = batch_i32
    if n_pad != N:
        # only the tiny int32 batch is padded (id G matches no graph)
        b_pad = jnp.pad(batch_i32, (0, n_pad - N), constant_values=G)
    batch_row = b_pad.reshape(1, n_pad)
    batch_col = b_pad.reshape(n_pad, 1)

    itemsize = np.dtype(node_input.dtype).itemsize

    # ---- pass A: per-graph [sum(x) | sum(x^2)] -------------------------------
    stats_cost = pl.CostEstimate(
        flops=int(2 * N * G * 2 * D + 3 * N * D),
        transcendentals=0,
        bytes_accessed=int(N * D * itemsize + 4 * n_pad + 4 * G * 2 * D))
    acc = pl.pallas_call(
        functools.partial(_stats_kernel, num_graphs=G, num_nodes=N,
                          node_tile=tn, mask_tail=(n_pad != N)),
        grid=(num_tiles,),
        in_specs=[pl.BlockSpec((1, tn), lambda i: (0, i)),
                  pl.BlockSpec((tn, D), lambda i: (i, 0))],
        out_specs=pl.BlockSpec((G, 2 * D), lambda i: (0, 0)),
        out_shape=jax.ShapeDtypeStruct((G, 2 * D), jnp.float32),
        compiler_params=pltpu.CompilerParams(
            dimension_semantics=("arbitrary",), vmem_limit_bytes=_VMEM_LIMIT),
        cost_estimate=stats_cost,
    )(batch_row, node_input)

    # ---- finalize: O(G*D) per-graph statistics in plain XLA (tiny) ------------
    s1 = acc[:, :D]
    s2 = acc[:, D:]
    cnt = jnp.zeros((G,), jnp.float32).at[batch_i32].add(1.0)
    inv_cnt = (1.0 / jnp.maximum(cnt, 1.0))[:, None]                 # empty-graph safe
    mean = s1 * inv_cnt                                              # [G, D]
    # sum over nodes of (x - mean*ms)^2 = S2 - (2*ms - ms^2) * mean * S1
    sum_f2 = s2 - (2.0 * ms_D - ms_D * ms_D) * mean * s1             # [G, D]
    gfn = jnp.maximum(jnp.dot(sum_f2, P), 0.0) * inv_cnt             # [G, F] component+mean
    norm_F = lax.rsqrt(gfn + eps) * w_F                              # [G, F]
    norm_D = jnp.dot(norm_F, E)                                      # [G, D]
    # fold mean/norm/bias into one per-graph table: out = x*scale + shift
    scale_D = norm_D
    shift_D = bias_D - mean * ms_D * norm_D
    table = jnp.concatenate([scale_D, shift_D], axis=-1)             # [G, 2D]

    # ---- pass B: per-node normalization (independent tiles -> "parallel") ------
    apply_cost = pl.CostEstimate(
        flops=int(2 * N * G * 2 * D + 2 * N * D),
        transcendentals=0,
        bytes_accessed=int(2 * N * D * itemsize + 4 * n_pad + 4 * G * 2 * D))
    out = pl.pallas_call(
        functools.partial(_apply_kernel, num_graphs=G, dim=D),
        grid=(num_tiles,),
        in_specs=[pl.BlockSpec((tn, 1), lambda i: (i, 0)),
                  pl.BlockSpec((tn, D), lambda i: (i, 0)),
                  pl.BlockSpec((G, 2 * D), lambda i: (0, 0))],
        out_specs=pl.BlockSpec((tn, D), lambda i: (i, 0)),
        out_shape=jax.ShapeDtypeStruct((N, D), node_input.dtype),
        compiler_params=pltpu.CompilerParams(
            dimension_semantics=("parallel",), vmem_limit_bytes=_VMEM_LIMIT),
        cost_estimate=apply_cost,
    )(batch_col, node_input, table)

    return out


# ----------------------------- pure-JAX reference ----------------------------- #

def reference(node_input, batch, num_graphs, params, irreps=IRREPS, eps=EPS):
    batch = batch.astype(jnp.int32)
    cnt = jnp.maximum(jnp.zeros((num_graphs,), jnp.float32).at[batch].add(1.0), 1.0)

    def seg_mean(v):
        s = jnp.zeros((num_graphs, v.shape[1]), v.dtype).at[batch].add(v)
        return s / cnt[:, None]

    node_mean = seg_mean(node_input)
    fields = []
    ix = iw = ib = ims = 0
    for mul, l, p in irreps:
        d = 2 * l + 1
        field = node_input[:, ix:ix + mul * d].reshape(-1, mul, d)
        fmean = node_mean[:, ix:ix + mul * d].reshape(-1, mul, d)
        ix += mul * d
        ms = params["mean_shift"][:, ims:ims + mul, :]
        ims += mul
        field = field - fmean[batch] * ms
        fnorm = (field ** 2).mean(-1)                      # 'component'
        fnorm = seg_mean(fnorm)                            # reduce='mean'
        fnorm = (fnorm + eps) ** (-0.5)
        w = params["affine_weight"][:, iw:iw + mul]
        iw += mul
        fnorm = fnorm * w
        field = field * fnorm[batch][:, :, None]
        if d == 1 and p == 1:
            b = params["affine_bias"][:, ib:ib + mul]
            ib += mul
            field = field + b.reshape(1, mul, 1)
        fields.append(field.reshape(-1, mul * d))
    return jnp.concatenate(fields, axis=-1)


if __name__ == "__main__":
    key = jax.random.PRNGKey(0)
    D, F, num_scalar = _irreps_meta(IRREPS)      # D=15, F=7, num_scalar=4
    params = init_params(IRREPS)

    # case 1: small graph pair (single tile, no padding)
    N, G = 8, 2
    x1 = jax.random.normal(key, (N, D), dtype=jnp.float32)
    batch1 = jnp.asarray([0, 0, 0, 1, 1, 1, 1, 1], dtype=jnp.int32)
    out1 = jax.block_until_ready(equivariant_graph_norm_v2(x1, batch1, G, params))
    ref1 = reference(x1, batch1, G, params)
    np.testing.assert_allclose(np.asarray(out1), np.asarray(ref1), rtol=1e-4, atol=1e-4)

    # case 2: N not a multiple of 8 (ragged tail masking) + an empty graph (count guard)
    N2, G2 = 13, 4
    k1, k2 = jax.random.split(key)
    x2 = jax.random.normal(k1, (N2, D), dtype=jnp.float32)
    batch2 = jax.random.randint(k2, (N2,), 0, 3).astype(jnp.int32)   # graph id 3 is empty
    out2 = jax.block_until_ready(equivariant_graph_norm_v2(x2, batch2, G2, params))
    ref2 = reference(x2, batch2, G2, params)
    np.testing.assert_allclose(np.asarray(out2), np.asarray(ref2), rtol=1e-4, atol=1e-4)

    # case 3: multi-tile grid with a ragged last tile (node_tile forced small)
    N3, G3 = 2500, 5
    k3, k4 = jax.random.split(k1)
    x3 = jax.random.normal(k3, (N3, D), dtype=jnp.float32)
    batch3 = jnp.sort(jax.random.randint(k4, (N3,), 0, G3)).astype(jnp.int32)
    out3 = jax.block_until_ready(
        equivariant_graph_norm_v2(x3, batch3, G3, params, node_tile=1024))
    ref3 = reference(x3, batch3, G3, params)
    np.testing.assert_allclose(np.asarray(out3), np.asarray(ref3), rtol=1e-3, atol=3e-4)

    print("KERNEL_OK")
</pallas_src>

<mosaic_0001>
module attributes {stable_mosaic.version = 11 : i64} {
  func.func @_stats_kernel(%arg0: i32, %arg1: memref<1x8xi32, #tpu.memory_space<vmem>>, %arg2: memref<8x15xf32, #tpu.memory_space<vmem>>, %arg3: memref<2x30xf32, #tpu.memory_space<vmem>>) attributes {dimension_semantics = [#tpu.dimension_semantics<arbitrary>], iteration_bounds = array<i64: 1>, scalar_prefetch = 0 : i64, scratch_operands = 0 : i64, tpu.core_type = #tpu.core_type<tc>, window_params = [{transform_indices = @transform_0, window_bounds = array<i64: 1, 8>}, {transform_indices = @transform_1, window_bounds = array<i64: 8, 15>}, {pipeline_mode = #tpu.pipeline_mode<synchronous>, transform_indices = @transform_2, window_bounds = array<i64: 2, 30>}]} {
    %c0_i32 = arith.constant 0 : i32
    %0 = arith.cmpi eq, %arg0, %c0_i32 : i32
    %1 = arith.extui %0 : i1 to i32
    %c0_i32_0 = arith.constant 0 : i32
    %2 = arith.cmpi ne, %1, %c0_i32_0 : i32
    scf.if %2 {
      %cst_8 = arith.constant 0.000000e+00 : f32
      %16 = vector.broadcast %cst_8 : f32 to vector<2x30xf32>
      %c0_9 = arith.constant 0 : index
      %c0_10 = arith.constant 0 : index
      %17 = vector.load %arg3[%c0_9, %c0_10] : memref<2x30xf32, #tpu.memory_space<vmem>>, vector<2x30xf32>
      tpu.vector_store %arg3[%c0_9, %c0_10], %16 {strides = array<i32>} : memref<2x30xf32, #tpu.memory_space<vmem>>, vector<2x30xf32>,
    } else {
    }
    %c0 = arith.constant 0 : index
    %c0_1 = arith.constant 0 : index
    %3 = vector.load %arg2[%c0, %c0_1] : memref<8x15xf32, #tpu.memory_space<vmem>>, vector<8x15xf32>
    %4 = arith.mulf %3, %3 : vector<8x15xf32>
    %5 = tpu.concatenate %3, %4 in 1 : vector<8x15xf32>, vector<8x15xf32> -> vector<8x30xf32>
    %c0_2 = arith.constant 0 : index
    %c0_3 = arith.constant 0 : index
    %6 = vector.load %arg1[%c0_2, %c0_3] : memref<1x8xi32, #tpu.memory_space<vmem>>, vector<1x8xi32>
    %7 = tpu.iota {dimensions = array<i32: 0>} : vector<2x8xi32>
    %8 = vector.broadcast %6 : vector<1x8xi32> to vector<2x8xi32>
    %9 = arith.cmpi eq, %7, %8 : vector<2x8xi32>
    %10 = arith.extui %9 : vector<2x8xi1> to vector<2x8xi32>
    %11 = arith.sitofp %10 : vector<2x8xi32> to vector<2x8xf32>
    %c0_4 = arith.constant 0 : index
    %c0_5 = arith.constant 0 : index
    %12 = vector.load %arg3[%c0_4, %c0_5] : memref<2x30xf32, #tpu.memory_space<vmem>>, vector<2x30xf32>
    %cst = arith.constant dense<0.000000e+00> : vector<2x30xf32>
    %13 = tpu.matmul %11, %5, %cst {dimension_numbers = #tpu.dot_dimension_numbers<[1], [0], [0], [1], [0, 0, 1, 1], [], []>} : vector<2x8xf32>, vector<8x30xf32>, vector<2x30xf32> -> vector<2x30xf32>
    %14 = arith.addf %12, %13 : vector<2x30xf32>
    %c0_6 = arith.constant 0 : index
    %c0_7 = arith.constant 0 : index
    %15 = vector.load %arg3[%c0_6, %c0_7] : memref<2x30xf32, #tpu.memory_space<vmem>>, vector<2x30xf32>
    tpu.vector_store %arg3[%c0_6, %c0_7], %14 {strides = array<i32>} : memref<2x30xf32, #tpu.memory_space<vmem>>, vector<2x30xf32>,
    return
  }
  func.func @transform_0(%arg0: i32) -> (i32, i32) {
    %c0_i32 = arith.constant 0 : i32
    %c0_i32_0 = arith.constant 0 : i32
    return %c0_i32, %arg0 : i32, i32
  }
  func.func @transform_1(%arg0: i32) -> (i32, i32) {
    %c0_i32 = arith.constant 0 : i32
    %c0_i32_0 = arith.constant 0 : i32
    return %arg0, %c0_i32 : i32, i32
  }
  func.func @transform_2(%arg0: i32) -> (i32, i32) {
    %c0_i32 = arith.constant 0 : i32
    %c0_i32_0 = arith.constant 0 : i32
    %c0_i32_1 = arith.constant 0 : i32
    return %c0_i32, %c0_i32_0 : i32, i32
  }
}

</mosaic_0001>

<llo_original>
// kernel: tpu_custom_call.1
$region0: #{tpu_custom_call.1}
  #allocation0 [shape = 'u32[]', space=smem, size = 0x4, offset = 0x4, fixed_abs, tag = 'smem constant byte address 0x4 - core index']
  #allocation1 [shape = 'u32[144,128]{1,0:T(1,128)}', space=vmem, size = 0x12000, scoped, tag = 'internal scratch']
  %s0 = inlined_call_operand.hbm [shape: s32[1,8], index: 0, kind: input, shape index: {}]
  %s1 = inlined_call_operand.hbm [shape: f32[8,15], index: 1, kind: input, shape index: {}]
  %s2 = inlined_call_operand.hbm [shape: f32[2,30], index: 2, kind: output, shape index: {}]
  %s3 = sld [smem:[#allocation0]]
  $region30: #{tpu_custom_call.1} parent=0
    _
  %s5 = ssub.s32 1, %s3
  %s6 = scalar_select 0, %s5, %s3
  $region1: #{tpu_custom_call.1} parent=0
    #allocation2 [shape = 'u8[512]{0}', space=vmem, size = 0x400, scoped, tag = 'input window, operand 0, single buffered']
    #allocation3 [shape = 's32[1]{0}', space=sflag, size = 0x4, scoped, tag = 'scoped memory for tpu_custom_call.1']
    #allocation4 [shape = 's32[1]{0}', space=sflag, size = 0x4, scoped, tag = 'scoped memory for tpu_custom_call.1']
    #allocation5 [shape = 'u8[4096]{0}', space=vmem, size = 0x1000, scoped, tag = 'input window, operand 1, single buffered']
    #allocation6 [shape = 's32[1]{0}', space=sflag, size = 0x4, scoped, tag = 'scoped memory for tpu_custom_call.1']
    #allocation7 [shape = 'u8[1024]{0}', space=vmem, size = 0x400, scoped, tag = 'output window, operand 0, single buffered']
    %7 = vsyncpa [#allocation3], 0
    %8 = vsyncpa [#allocation6], 0
    %9 = vsyncpa [#allocation4], 0
    // Predicated region
    $region2: #{tpu_custom_call.1} parent=1 // pred_check
      _
    $region3: #{tpu_custom_call.1} parent=1 // pred_check_branch
      %11 = sbr.rel (0) target = $region5
    $region4: #{tpu_custom_call.1} parent=1 // pred_region
      %s13 = ssub.s32 16, 16
      %14 = vsyncadd [#allocation3], %s13
      %s16 = sshll.u32 [#allocation2], 4
      %s17 = int_to_ptr.vmem [resolvable:$true] %s16
      %19 = dma.hbm_to_vmem [thread:$0]  %s0, 16, %s17, [#allocation3]
    $region5: #{tpu_custom_call.1} parent=1 // pred_fallthru
      _
    // Predicated region
    $region6: #{tpu_custom_call.1} parent=1 // pred_check
      _
    $region7: #{tpu_custom_call.1} parent=1 // pred_check_branch
      %21 = sbr.rel (0) target = $region9
    $region8: #{tpu_custom_call.1} parent=1 // pred_region
      %s23 = ssub.s32 128, 128
      %24 = vsyncadd [#allocation6], %s23
      %s26 = sshll.u32 [#allocation5], 4
      %s27 = int_to_ptr.vmem [resolvable:$true] %s26
      %29 = dma.hbm_to_vmem [thread:$0]  %s1, 128, %s27, [#allocation6]
    $region9: #{tpu_custom_call.1} parent=1 // pred_fallthru
      _
    // Predicated region
    $region10: #{tpu_custom_call.1} parent=1 // pred_check
      _
    $region11: #{tpu_custom_call.1} parent=1 // pred_check_branch
      %31 = sbr.rel (0) target = $region13
    $region12: #{tpu_custom_call.1} parent=1 // pred_region
      %32 = dma.done [#allocation3], 16
    $region13: #{tpu_custom_call.1} parent=1 // pred_fallthru
      _
    // Predicated region
    $region14: #{tpu_custom_call.1} parent=1 // pred_check
      _
    $region15: #{tpu_custom_call.1} parent=1 // pred_check_branch
      %34 = sbr.rel (0) target = $region17
    $region16: #{tpu_custom_call.1} parent=1 // pred_region
      %35 = dma.done [#allocation6], 128
    $region17: #{tpu_custom_call.1} parent=1 // pred_fallthru
      _
    %p36 = scmp.eq.s32.totalorder 0, 0
    // Predicated region
    $region18: #{tpu_custom_call.1} parent=1 // pred_check
      %p37 = pneg %p36
    $region19: #{tpu_custom_call.1} parent=1 // pred_check_branch
      %39 = sbr.rel (%p37) target = $region21
    $region20: #{tpu_custom_call.1} parent=1 // pred_region
      %vm40 = vcmask 238592
      %41 = vst.msk [vmem:[#allocation7] sm:$0x3] %vm40, 0.0
    $region21: #{tpu_custom_call.1} parent=1 // pred_fallthru
      _
    %v42 = vld [vmem:[#allocation5] sm:$0xff]
    %v43 = vmul.f32 %v42, %v42
    %45 = vrot.lane.b32.xlu0 %v43, 15
    %v46 = vpop.permute.xlu0 %45
    %vm48 = vcmask 121856
    %v49 = vsel %vm48, %v42, %v46
    %v50 = vld [vmem:[#allocation2] sm:$0x1]
    %v51 = vlaneseq
    %v52 = vshrl.u32 %v51, 7
    %v53 = vlaneseq
    %v54 = vshrl.u32 %v53, 7
    %v55 = vsub.s32 0, %v54
    %v56 = vrot.slane %v50, %v55
    %vm57 = vcmp.eq.s32.totalorder %v52, %v56
    %v58 = vsel %vm57, 1, 0
    %v59 = vcvt.s32.f32 %v58
    %v60 = vld [vmem:[#allocation7] sm:$0x3]
    %vm61 = vcmask 64512
    %v63 = vsel %vm61, %v59, 0
    %65 = vmatprep.subr.mxu0 0.0
    %66 = vmatpush1.msra.mxu0 %v49
    %67 = vmatprep.subr.mxu0 0.0
    %68 = vmatpush1.msra.mxu0 0.0
    %69 = vmatprep.subr.mxu0 0.0
    %70 = vmatpush1.msra.mxu0 0.0
    %71 = vmatprep.subr.mxu0 0.0
    %72 = vmatpush1.msra.mxu0 0.0
    %73 = vmatprep.subr.mxu0 0.0
    %74 = vmatpush1.msra.mxu0 0.0
    %75 = vmatprep.subr.mxu0 0.0
    %76 = vmatpush1.msra.mxu0 0.0
    %77 = vmatprep.subr.mxu0 0.0
    %78 = vmatpush1.msra.mxu0 0.0
    %79 = vmatprep.subr.mxu0 0.0
    %80 = vmatpush1.msra.mxu0 0.0
    %81 = vmatprep.subr.mxu0 0.0
    %82 = vmatpush1.msra.mxu0 0.0
    %83 = vmatprep.subr.mxu0 0.0
    %84 = vmatpush1.msra.mxu0 0.0
    %85 = vmatprep.subr.mxu0 0.0
    %86 = vmatpush1.msra.mxu0 0.0
    %87 = vmatprep.subr.mxu0 0.0
    %88 = vmatpush1.msra.mxu0 0.0
    %89 = vmatprep.subr.mxu0 0.0
    %90 = vmatpush1.msra.mxu0 0.0
    %91 = vmatprep.subr.mxu0 0.0
    %92 = vmatpush1.msra.mxu0 0.0
    %93 = vmatprep.subr.mxu0 0.0
    %94 = vmatpush1.msra.mxu0 0.0
    %95 = vmatprep.subr.mxu0 0.0
    %96 = vmatpush1.msra.mxu0 0.0
    %97 = vmatprep.subr.mxu0 0.0
    %98 = vmatpush1.msra.mxu0 0.0
    %99 = vmatprep.subr.mxu0 0.0
    %100 = vmatpush1.msra.mxu0 0.0
    %101 = vmatprep.subr.mxu0 0.0
    %102 = vmatpush1.msra.mxu0 0.0
    %103 = vmatprep.subr.mxu0 0.0
    %104 = vmatpush1.msra.mxu0 0.0
    %105 = vmatprep.subr.mxu0 0.0
    %106 = vmatpush1.msra.mxu0 0.0
    %107 = vmatprep.subr.mxu0 0.0
    %108 = vmatpush1.msra.mxu0 0.0
    %109 = vmatprep.subr.mxu0 0.0
    %110 = vmatpush1.msra.mxu0 0.0
    %111 = vmatprep.subr.mxu0 0.0
    %112 = vmatpush1.msra.mxu0 0.0
    %113 = vmatprep.subr.mxu0 0.0
    %114 = vmatpush1.msra.mxu0 0.0
    %115 = vmatprep.subr.mxu0 0.0
    %116 = vmatpush1.msra.mxu0 0.0
    %117 = vmatprep.subr.mxu0 0.0
    %118 = vmatpush1.msra.mxu0 0.0
    %119 = vmatprep.subr.mxu0 0.0
    %120 = vmatpush1.msra.mxu0 0.0
    %121 = vmatprep.subr.mxu0 0.0
    %122 = vmatpush1.msra.mxu0 0.0
    %123 = vmatprep.subr.mxu0 0.0
    %124 = vmatpush1.msra.mxu0 0.0
    %125 = vmatprep.subr.mxu0 0.0
    %126 = vmatpush1.msra.mxu0 0.0
    %127 = vmatprep.subr.mxu0 0.0
    %128 = vmatpush1.msra.mxu0 0.0
    %129 = vmatprep.mubr.f32.mxu0 0.0
    %130 = vmatmul.mubr.f32.gmra.mrb[0].mxu0 %v63
    %v131 = vpop.f32.mrb[0].mxu0
    %v132 = vadd.f32 0.0, %v131
    %v133 = vpop.f32.mrb[0].mxu0
    %134 = vdwg.mxu0
    %v135 = vadd.f32 %v60, %v132
    %vm136 = vcmask 238592
    %137 = vst.msk [vmem:[#allocation7] sm:$0x3] %vm136, %v135
    // Predicated region
    $region22: #{tpu_custom_call.1} parent=1 // pred_check
      _
    $region23: #{tpu_custom_call.1} parent=1 // pred_check_branch
      %139 = sbr.rel (0) target = $region25
    $region24: #{tpu_custom_call.1} parent=1 // pred_region
      %s141 = ssub.s32 32, 32
      %142 = vsyncadd [#allocation4], %s141
      %s144 = sshll.u32 [#allocation7], 4
      %s145 = int_to_ptr.vmem [resolvable:$true] %s144
      %147 = dma.vmem_to_hbm [thread:$0]  %s145, 32, %s2, [#allocation4]
    $region25: #{tpu_custom_call.1} parent=1 // pred_fallthru
      _
    // Predicated region
    $region26: #{tpu_custom_call.1} parent=1 // pred_check
      _
    $region27: #{tpu_custom_call.1} parent=1 // pred_check_branch
      %149 = sbr.rel (0) target = $region29
    $region28: #{tpu_custom_call.1} parent=1 // pred_region
      %150 = dma.done [#allocation4], 32
    $region29: #{tpu_custom_call.1} parent=1 // pred_fallthru
      _
    %151 = vsyncpa [#allocation3], 1
    %152 = vsyncpa [#allocation6], 1
    %153 = vsyncpa [#allocation4], 1

</llo_original>
